<compile_context>
chip_gen: v7x
topology: tpu7x:2x2x1
jax: 0.10.0
libtpu: 0.0.40
codegen_flags: <defaults>
</compile_context>

<pallas_src>
import jax
import jax.numpy as jnp
from jax.experimental import pallas as pl
from jax.experimental.pallas import tpu as pltpu


def _round_up(x, m):
    return ((x + m - 1) // m) * m


def _vmem_capacity_bytes():
    try:
        return int(pltpu.get_tpu_info().vmem_capacity_bytes)
    except Exception:
        return 64 * 1024 * 1024  # conservative fallback (v7x per-TC physical VMEM)


# ---------------------------------------------------------------------------
# Kernels
# ---------------------------------------------------------------------------
# Single reduction step (tk == d): no accumulator scratch, direct fused epilogue.
def _mlp_kernel_1k(x_ref, w_ref, o_ref):
    y = jnp.dot(
        x_ref[...].astype(jnp.bfloat16),          # bf16 MXU operands,
        w_ref[...].astype(jnp.bfloat16),          # f32 accumulation
        preferred_element_type=jnp.float32,
    )
    o_ref[...] = jnp.maximum(y, 0.0).astype(o_ref.dtype)


def _mlp_kernel_1k_perturb(x_ref, p_ref, w_ref, o_ref):
    xp = x_ref[...] + p_ref[...]                  # perturb add in f32 (v5e-friendly)
    y = jnp.dot(
        xp.astype(jnp.bfloat16),
        w_ref[...].astype(jnp.bfloat16),
        preferred_element_type=jnp.float32,
    )
    o_ref[...] = jnp.maximum(y, 0.0).astype(o_ref.dtype)


# d-tiled fallback (grid axis l over the reduction dim): f32 accumulator scratch.
def _mlp_kernel_acc(x_ref, w_ref, o_ref, acc_ref):
    l = pl.program_id(2)

    @pl.when(l == 0)
    def _():
        acc_ref[...] = jnp.zeros_like(acc_ref)

    acc_ref[...] += jnp.dot(
        x_ref[...].astype(jnp.bfloat16),
        w_ref[...].astype(jnp.bfloat16),
        preferred_element_type=jnp.float32,
    )

    @pl.when(l == pl.num_programs(2) - 1)
    def _():
        o_ref[...] = jnp.maximum(acc_ref[...], 0.0).astype(o_ref.dtype)


def _mlp_kernel_acc_perturb(x_ref, p_ref, w_ref, o_ref, acc_ref):
    l = pl.program_id(2)

    @pl.when(l == 0)
    def _():
        acc_ref[...] = jnp.zeros_like(acc_ref)

    xp = x_ref[...] + p_ref[...]
    acc_ref[...] += jnp.dot(
        xp.astype(jnp.bfloat16),
        w_ref[...].astype(jnp.bfloat16),
        preferred_element_type=jnp.float32,
    )

    @pl.when(l == pl.num_programs(2) - 1)
    def _():
        o_ref[...] = jnp.maximum(acc_ref[...], 0.0).astype(o_ref.dtype)


# ---------------------------------------------------------------------------
# Tiling / config
# ---------------------------------------------------------------------------
def _pick_config(N, d, k, has_perturb):
    """Return (tm, tn, tk, d_pad, single_k)."""
    vmem_cap = _vmem_capacity_bytes()
    budget = vmem_cap // 2  # double-buffered working-set budget, leaves headroom

    # Output-column tile: full k when reasonable -> j axis trivial, weight stripe
    # stays resident in VMEM and activations are streamed from HBM exactly once.
    tn = k if k <= 2048 else 1024

    # Batch tile (multiple of 8 unless it is the full batch).
    tm = N if N <= 512 else 512

    act = 2 if has_perturb else 1

    def working_set(tm_, tk_, single):
        a = act * tm_ * tk_ * 4 * (2 if single else 3)   # Buffered(3) when K-tiled
        w = 2 * tk_ * tn * 4
        o = 2 * tm_ * tn * 4
        s = 0 if single else tm_ * tn * 4                # f32 accumulator scratch
        return a + w + o + s

    # Prefer a single reduction step (tk == d): no activation padding, no
    # accumulator scratch, weight fetched from HBM once.
    cand = tm
    while True:
        if working_set(cand, d, True) <= budget:
            tm_s = cand
            # Give both v7x TensorCores work when the parallel grid would be 1x1.
            if N >= 128 and pl.cdiv(N, cand) == 1 and pl.cdiv(k, tn) == 1:
                tm_s = _round_up((N + 1) // 2, 8)
            return tm_s, tn, d, d, True
        if cand <= 8:
            break
        cand = _round_up(max(cand // 2, 8), 8)

    # Fallback: tile the reduction dim (zero-pad d to a 128 multiple so tail K
    # blocks contribute exactly zero to the accumulator).
    # TODO(synk): mask the last K block in-kernel (broadcasted_iota) instead of
    # materializing padded copies of x / perturb in HBM.
    d_pad = _round_up(d, 128)
    tk = 128
    for c in (1024, 512, 256, 128):
        if d_pad % c == 0 and working_set(tm, c, False) <= budget:
            tk = c
            break
    while tm > 64 and working_set(tm, tk, False) > budget:
        tm = _round_up(max(tm // 2, 64), 8)
    return tm, tn, tk, d_pad, False


def _vmem_limit_bytes(tm, tn, tk, has_perturb, single_k):
    act = 2 if has_perturb else 1
    nbuf = 2 if single_k else 3
    need = act * nbuf * tm * tk * 4 + 2 * tk * tn * 4 + 2 * tm * tn * 4
    if not single_k:
        need += tm * tn * 4
    limit = max(need + (4 << 20), 32 << 20)       # headroom for internal scratch
    return min(limit, int(_vmem_capacity_bytes() * 0.9))


# ---------------------------------------------------------------------------
# pallas_call builders
# ---------------------------------------------------------------------------
def _build_call_single(has_perturb, N, d, k, tm, tn, out_dtype):
    gi, gj = pl.cdiv(N, tm), pl.cdiv(k, tn)
    act = 2 if has_perturb else 1
    # Grid order minimizing total HBM traffic:
    #   j outer: activations re-streamed gj times, weight streamed once
    #   i outer: weight re-streamed gi times, activations streamed once
    j_outer = (gj * act * N * d + d * k) <= (act * N * d + gi * d * k)
    if j_outer:
        grid = (gj, gi)
        x_map = lambda j, i: (i, 0)
        w_map = lambda j, i: (0, j)
        o_map = lambda j, i: (i, j)
    else:
        grid = (gi, gj)
        x_map = lambda i, j: (i, 0)
        w_map = lambda i, j: (0, j)
        o_map = lambda i, j: (i, j)

    in_specs = [pl.BlockSpec((tm, d), x_map)]
    if has_perturb:
        in_specs.append(pl.BlockSpec((tm, d), x_map))
    in_specs.append(pl.BlockSpec((d, tn), w_map))

    kernel = _mlp_kernel_1k_perturb if has_perturb else _mlp_kernel_1k
    return pl.pallas_call(
        kernel,
        out_shape=jax.ShapeDtypeStruct((N, k), out_dtype),
        grid_spec=pltpu.PrefetchScalarGridSpec(
            num_scalar_prefetch=0,
            grid=grid,
            in_specs=in_specs,
            out_specs=pl.BlockSpec((tm, tn), o_map),
        ),
        compiler_params=pltpu.CompilerParams(
            dimension_semantics=("parallel", "parallel"),
            vmem_limit_bytes=_vmem_limit_bytes(tm, tn, d, has_perturb, True),
        ),
    )


def _build_call_multik(has_perturb, N, d_pad, k, tm, tn, tk, out_dtype):
    grid = (pl.cdiv(k, tn), pl.cdiv(N, tm), d_pad // tk)

    def act_spec():
        return pl.BlockSpec(
            (tm, tk), lambda j, i, l: (i, l), pipeline_mode=pl.Buffered(3)
        )

    in_specs = [act_spec()]
    if has_perturb:
        in_specs.append(act_spec())
    # Weight stripe: block index independent of the batch axis.
    in_specs.append(pl.BlockSpec((tk, tn), lambda j, i, l: (l, j)))

    kernel = _mlp_kernel_acc_perturb if has_perturb else _mlp_kernel_acc
    return pl.pallas_call(
        kernel,
        out_shape=jax.ShapeDtypeStruct((N, k), out_dtype),
        grid_spec=pltpu.PrefetchScalarGridSpec(
            num_scalar_prefetch=0,
            grid=grid,
            in_specs=in_specs,
            out_specs=pl.BlockSpec((tm, tn), lambda j, i, l: (i, j)),
            scratch_shapes=[pltpu.VMEM((tm, tn), jnp.float32)],
        ),
        compiler_params=pltpu.CompilerParams(
            dimension_semantics=("parallel", "parallel", "arbitrary"),
            vmem_limit_bytes=_vmem_limit_bytes(tm, tn, tk, has_perturb, False),
        ),
    )


# ---------------------------------------------------------------------------
# Forward wrappers
# ---------------------------------------------------------------------------
@jax.jit
def _mlp_forward_noperturb(x, w_t):
    N, d = x.shape
    _, k = w_t.shape
    tm, tn, tk, d_pad, single_k = _pick_config(N, d, k, has_perturb=False)
    if single_k:
        return _build_call_single(False, N, d, k, tm, tn, x.dtype)(x, w_t)
    if d_pad != d:
        x = jnp.pad(x, ((0, 0), (0, d_pad - d)))
        w_t = jnp.pad(w_t, ((0, d_pad - d), (0, 0)))
    return _build_call_multik(False, N, d_pad, k, tm, tn, tk, x.dtype)(x, w_t)


@jax.jit
def _mlp_forward_perturb(x, w_t, perturb):
    N, d = x.shape
    _, k = w_t.shape
    tm, tn, tk, d_pad, single_k = _pick_config(N, d, k, has_perturb=True)
    if single_k:
        return _build_call_single(True, N, d, k, tm, tn, x.dtype)(x, perturb, w_t)
    if d_pad != d:
        x = jnp.pad(x, ((0, 0), (0, d_pad - d)))
        perturb = jnp.pad(perturb, ((0, 0), (0, d_pad - d)))
        w_t = jnp.pad(w_t, ((0, d_pad - d), (0, 0)))
    return _build_call_multik(True, N, d_pad, k, tm, tn, tk, x.dtype)(x, perturb, w_t)


def mlp_forward(x, w_t, perturb=None):
    """x: (N, d), w_t: (d, k) (transposed PyTorch Linear weight), perturb: (N, d) or None."""
    if perturb is None:
        return _mlp_forward_noperturb(x, w_t)   # no zero-perturb DMA
    return _mlp_forward_perturb(x, w_t, perturb)


# ---------------------------------------------------------------------------
# References
# ---------------------------------------------------------------------------
def mlp_reference_bf16(x, w_t, perturb=None):
    # Matches kernel numerics: bf16 operands, f32 accumulation.
    if perturb is not None:
        x = x + perturb
    y = jnp.dot(x.astype(jnp.bfloat16), w_t.astype(jnp.bfloat16),
                preferred_element_type=jnp.float32)
    return jnp.maximum(y, 0.0).astype(x.dtype)


def mlp_reference_f32(x, w_t, perturb=None):
    if perturb is not None:
        x = x + perturb
    return jnp.maximum(x @ w_t, 0.0)


if __name__ == "__main__":
    # Small shapes consistent with the module: k = 512 (spec), data-dependent d.
    N, d, k = 16, 128, 512

    key = jax.random.PRNGKey(0)
    kx, kp, kw = jax.random.split(key, 3)

    x = jax.random.normal(kx, (N, d), dtype=jnp.float32)
    perturb = 0.1 * jax.random.normal(kp, (N, d), dtype=jnp.float32)
    # PyTorch nn.Linear weight is (k, d); init deterministically and transpose.
    w = jax.random.normal(kw, (k, d), dtype=jnp.float32) * (1.0 / jnp.sqrt(d))
    w_t = w.T  # (d, k)

    out = mlp_forward(x, w_t, perturb)
    jax.block_until_ready(out)
    assert out.shape == (N, k)
    # Strict against a bf16-operand / f32-accumulate reference (same numerics).
    assert jnp.allclose(out, mlp_reference_bf16(x, w_t, perturb), atol=2e-3, rtol=2e-3)
    # Loose sanity check against the pure-f32 reference.
    assert jnp.allclose(out, mlp_reference_f32(x, w_t, perturb), atol=5e-2, rtol=5e-2)

    # Also exercise the perturb=None path (matches MLP.forward default).
    out2 = mlp_forward(x, w_t, None)
    jax.block_until_ready(out2)
    assert jnp.allclose(out2, mlp_reference_bf16(x, w_t, None), atol=2e-3, rtol=2e-3)

    print("KERNEL_OK")
</pallas_src>

<mosaic_0001>
module attributes {stable_mosaic.version = 11 : i64} {
  func.func @_mlp_kernel_1k_perturb(%arg0: i32, %arg1: i32, %arg2: memref<16x128xf32, #tpu.memory_space<vmem>>, %arg3: memref<16x128xf32, #tpu.memory_space<vmem>>, %arg4: memref<128x512xf32, #tpu.memory_space<vmem>>, %arg5: memref<16x512xf32, #tpu.memory_space<vmem>>) attributes {dimension_semantics = [#tpu.dimension_semantics<parallel>, #tpu.dimension_semantics<parallel>], iteration_bounds = array<i64: 1, 1>, scalar_prefetch = 0 : i64, scratch_operands = 0 : i64, tpu.core_type = #tpu.core_type<tc>, window_params = [{transform_indices = @transform_0, window_bounds = array<i64: 16, 128>}, {transform_indices = @transform_1, window_bounds = array<i64: 16, 128>}, {transform_indices = @transform_2, window_bounds = array<i64: 128, 512>}, {transform_indices = @transform_3, window_bounds = array<i64: 16, 512>}]} {
    %c0 = arith.constant 0 : index
    %c0_0 = arith.constant 0 : index
    %0 = vector.load %arg2[%c0, %c0_0] : memref<16x128xf32, #tpu.memory_space<vmem>>, vector<16x128xf32>
    %c0_1 = arith.constant 0 : index
    %c0_2 = arith.constant 0 : index
    %1 = vector.load %arg3[%c0_1, %c0_2] : memref<16x128xf32, #tpu.memory_space<vmem>>, vector<16x128xf32>
    %2 = arith.addf %0, %1 : vector<16x128xf32>
    %3 = arith.truncf %2 : vector<16x128xf32> to vector<16x128xbf16>
    %c0_3 = arith.constant 0 : index
    %c0_4 = arith.constant 0 : index
    %4 = vector.load %arg4[%c0_3, %c0_4] : memref<128x512xf32, #tpu.memory_space<vmem>>, vector<128x512xf32>
    %5 = arith.truncf %4 : vector<128x512xf32> to vector<128x512xbf16>
    %cst = arith.constant dense<0.000000e+00> : vector<16x512xf32>
    %6 = tpu.matmul %3, %5, %cst {dimension_numbers = #tpu.dot_dimension_numbers<[1], [0], [0], [1], [0, 0, 1, 1], [], []>} : vector<16x128xbf16>, vector<128x512xbf16>, vector<16x512xf32> -> vector<16x512xf32>
    %cst_5 = arith.constant 0.000000e+00 : f32
    %7 = vector.broadcast %cst_5 : f32 to vector<16x512xf32>
    %8 = arith.maximumf %6, %7 : vector<16x512xf32>
    %c0_6 = arith.constant 0 : index
    %c0_7 = arith.constant 0 : index
    %9 = vector.load %arg5[%c0_6, %c0_7] : memref<16x512xf32, #tpu.memory_space<vmem>>, vector<16x512xf32>
    tpu.vector_store %arg5[%c0_6, %c0_7], %8 {strides = array<i32>} : memref<16x512xf32, #tpu.memory_space<vmem>>, vector<16x512xf32>,
    return
  }
  func.func @transform_0(%arg0: i32, %arg1: i32) -> (i32, i32) {
    %c0_i32 = arith.constant 0 : i32
    %c0_i32_0 = arith.constant 0 : i32
    return %arg1, %c0_i32 : i32, i32
  }
  func.func @transform_1(%arg0: i32, %arg1: i32) -> (i32, i32) {
    %c0_i32 = arith.constant 0 : i32
    %c0_i32_0 = arith.constant 0 : i32
    return %arg1, %c0_i32 : i32, i32
  }
  func.func @transform_2(%arg0: i32, %arg1: i32) -> (i32, i32) {
    %c0_i32 = arith.constant 0 : i32
    %c0_i32_0 = arith.constant 0 : i32
    return %c0_i32, %arg0 : i32, i32
  }
  func.func @transform_3(%arg0: i32, %arg1: i32) -> (i32, i32) {
    %c0_i32 = arith.constant 0 : i32
    return %arg1, %arg0 : i32, i32
  }
}

</mosaic_0001>

<llo_original>
// kernel: _mlp_forward_perturb.1
$region0: #{_mlp_forward_perturb.1}
  #allocation0 [shape = 'u32[]', space=smem, size = 0x4, offset = 0x4, fixed_abs, tag = 'smem constant byte address 0x4 - core index']
  #allocation1 [shape = 'u32[144,128]{1,0:T(1,128)}', space=vmem, size = 0x12000, scoped, tag = 'internal scratch']
  %s0 = inlined_call_operand.hbm [shape: f32[16,128], index: 0, kind: input, shape index: {}]
  %s1 = inlined_call_operand.hbm [shape: f32[16,128], index: 1, kind: input, shape index: {}]
  %s2 = inlined_call_operand.hbm [shape: f32[128,512], index: 2, kind: input, shape index: {}]
  %s3 = inlined_call_operand.hbm [shape: f32[16,512], index: 3, kind: output, shape index: {}]
  %s4 = sld [smem:[#allocation0]]
  $region34: #{_mlp_forward_perturb.1} parent=0
    _
  %s6 = ssub.s32 1, %s4
  %s7 = scalar_select 0, %s6, %s4
  $region1: #{_mlp_forward_perturb.1} parent=0
    #allocation2 [shape = 'u8[8192]{0}', space=vmem, size = 0x2000, scoped, tag = 'input window, operand 0, single buffered']
    #allocation3 [shape = 's32[1]{0}', space=sflag, size = 0x4, scoped, tag = 'scoped memory for _mlp_forward_perturb.1']
    #allocation4 [shape = 's32[1]{0}', space=sflag, size = 0x4, scoped, tag = 'scoped memory for _mlp_forward_perturb.1']
    #allocation5 [shape = 'u8[8192]{0}', space=vmem, size = 0x2000, scoped, tag = 'input window, operand 1, single buffered']
    #allocation6 [shape = 's32[1]{0}', space=sflag, size = 0x4, scoped, tag = 'scoped memory for _mlp_forward_perturb.1']
    #allocation7 [shape = 'u8[262144]{0}', space=vmem, size = 0x40000, scoped, tag = 'input window, operand 2, single buffered']
    #allocation8 [shape = 'u8[32768]{0}', space=vmem, size = 0x8000, scoped, tag = 'output window, operand 0, single buffered']
    %8 = vsyncpa [#allocation3], 0
    %9 = vsyncpa [#allocation6], 0
    %10 = vsyncpa [#allocation4], 0
    // Predicated region
    $region2: #{_mlp_forward_perturb.1} parent=1 // pred_check
      _
    $region3: #{_mlp_forward_perturb.1} parent=1 // pred_check_branch
      %12 = sbr.rel (0) target = $region5
    $region4: #{_mlp_forward_perturb.1} parent=1 // pred_region
      %s14 = ssub.s32 256, 256
      %15 = vsyncadd [#allocation3], %s14
      %s16 = sshll.u32 [#allocation2], 4
      %s17 = int_to_ptr.vmem [resolvable:$true] %s16
      %22 = dma.hbm_to_vmem [thread:$0]  %s0, 256, %s17, [#allocation3], 128, 128, 8
    $region5: #{_mlp_forward_perturb.1} parent=1 // pred_fallthru
      _
    // Predicated region
    $region6: #{_mlp_forward_perturb.1} parent=1 // pred_check
      _
    $region7: #{_mlp_forward_perturb.1} parent=1 // pred_check_branch
      %24 = sbr.rel (0) target = $region9
    $region8: #{_mlp_forward_perturb.1} parent=1 // pred_region
      %s26 = ssub.s32 256, 256
      %27 = vsyncadd [#allocation6], %s26
      %s28 = sshll.u32 [#allocation5], 4
      %s29 = int_to_ptr.vmem [resolvable:$true] %s28
      %34 = dma.hbm_to_vmem [thread:$0]  %s1, 256, %s29, [#allocation6], 128, 128, 8
    $region9: #{_mlp_forward_perturb.1} parent=1 // pred_fallthru
      _
    // Predicated region
    $region10: #{_mlp_forward_perturb.1} parent=1 // pred_check
      _
    $region11: #{_mlp_forward_perturb.1} parent=1 // pred_check_branch
      %36 = sbr.rel (0) target = $region13
    $region12: #{_mlp_forward_perturb.1} parent=1 // pred_region
      %s38 = ssub.s32 8192, 8192
      %39 = vsyncadd [#allocation6], %s38
      %s40 = sshll.u32 [#allocation7], 4
      %s41 = int_to_ptr.vmem [resolvable:$true] %s40
      %46 = dma.hbm_to_vmem [thread:$0]  %s2, 8192, %s41, [#allocation6], 512, 512, 32
    $region13: #{_mlp_forward_perturb.1} parent=1 // pred_fallthru
      _
    // Predicated region
    $region14: #{_mlp_forward_perturb.1} parent=1 // pred_check
      _
    $region15: #{_mlp_forward_perturb.1} parent=1 // pred_check_branch
      %48 = sbr.rel (0) target = $region17
    $region16: #{_mlp_forward_perturb.1} parent=1 // pred_region
      %49 = dma.done [#allocation3], 256
    $region17: #{_mlp_forward_perturb.1} parent=1 // pred_fallthru
      _
    // Predicated region
    $region18: #{_mlp_forward_perturb.1} parent=1 // pred_check
      _
    $region19: #{_mlp_forward_perturb.1} parent=1 // pred_check_branch
      %51 = sbr.rel (0) target = $region21
    $region20: #{_mlp_forward_perturb.1} parent=1 // pred_region
      %52 = dma.done [#allocation6], 256
    $region21: #{_mlp_forward_perturb.1} parent=1 // pred_fallthru
      _
    // Predicated region
    $region22: #{_mlp_forward_perturb.1} parent=1 // pred_check
      _
    $region23: #{_mlp_forward_perturb.1} parent=1 // pred_check_branch
      %54 = sbr.rel (0) target = $region25
    $region24: #{_mlp_forward_perturb.1} parent=1 // pred_region
      %55 = dma.done [#allocation6], 8192
    $region25: #{_mlp_forward_perturb.1} parent=1 // pred_fallthru
      _
    %v57 = vld [vmem:[#allocation2] sm:$0xff]
    %v58 = vld [vmem:[#allocation2 + $0x8] sm:$0xff]
    %v59 = vld [vmem:[#allocation5] sm:$0xff]
    %v60 = vld [vmem:[#allocation5 + $0x8] sm:$0xff]
    %v61 = vadd.f32 %v57, %v59
    %v62 = vadd.f32 %v58, %v60
    %v63 = vpack.c.bf16 %v62, %v61
    %v64 = vld [vmem:[#allocation7] sm:$0xff]
    %v65 = vld [vmem:[#allocation7 + $0x8] sm:$0xff]
    %v66 = vld [vmem:[#allocation7 + $0x10] sm:$0xff]
    %v67 = vld [vmem:[#allocation7 + $0x18] sm:$0xff]
    %v68 = vld [vmem:[#allocation7 + $0x20] sm:$0xff]
    %v69 = vld [vmem:[#allocation7 + $0x28] sm:$0xff]
    %v70 = vld [vmem:[#allocation7 + $0x30] sm:$0xff]
    %v71 = vld [vmem:[#allocation7 + $0x38] sm:$0xff]
    %v72 = vld [vmem:[#allocation7 + $0x40] sm:$0xff]
    %v73 = vld [vmem:[#allocation7 + $0x48] sm:$0xff]
    %v74 = vld [vmem:[#allocation7 + $0x50] sm:$0xff]
    %v75 = vld [vmem:[#allocation7 + $0x58] sm:$0xff]
    %v76 = vld [vmem:[#allocation7 + $0x60] sm:$0xff]
    %v77 = vld [vmem:[#allocation7 + $0x68] sm:$0xff]
    %v78 = vld [vmem:[#allocation7 + $0x70] sm:$0xff]
    %v79 = vld [vmem:[#allocation7 + $0x78] sm:$0xff]
    %v80 = vld [vmem:[#allocation7 + $0x80] sm:$0xff]
    %v81 = vld [vmem:[#allocation7 + $0x88] sm:$0xff]
    %v82 = vld [vmem:[#allocation7 + $0x90] sm:$0xff]
    %v83 = vld [vmem:[#allocation7 + $0x98] sm:$0xff]
    %v84 = vld [vmem:[#allocation7 + $0xa0] sm:$0xff]
    %v85 = vld [vmem:[#allocation7 + $0xa8] sm:$0xff]
    %v86 = vld [vmem:[#allocation7 + $0xb0] sm:$0xff]
    %v87 = vld [vmem:[#allocation7 + $0xb8] sm:$0xff]
    %v88 = vld [vmem:[#allocation7 + $0xc0] sm:$0xff]
    %v89 = vld [vmem:[#allocation7 + $0xc8] sm:$0xff]
    %v90 = vld [vmem:[#allocation7 + $0xd0] sm:$0xff]
    %v91 = vld [vmem:[#allocation7 + $0xd8] sm:$0xff]
    %v92 = vld [vmem:[#allocation7 + $0xe0] sm:$0xff]
    %v93 = vld [vmem:[#allocation7 + $0xe8] sm:$0xff]
    %v94 = vld [vmem:[#allocation7 + $0xf0] sm:$0xff]
    %v95 = vld [vmem:[#allocation7 + $0xf8] sm:$0xff]
    %v96 = vld [vmem:[#allocation7 + $0x100] sm:$0xff]
    %v97 = vld [vmem:[#allocation7 + $0x108] sm:$0xff]
    %v98 = vld [vmem:[#allocation7 + $0x110] sm:$0xff]
    %v99 = vld [vmem:[#allocation7 + $0x118] sm:$0xff]
    %v100 = vld [vmem:[#allocation7 + $0x120] sm:$0xff]
    %v101 = vld [vmem:[#allocation7 + $0x128] sm:$0xff]
    %v102 = vld [vmem:[#allocation7 + $0x130] sm:$0xff]
    %v103 = vld [vmem:[#allocation7 + $0x138] sm:$0xff]
    %v104 = vld [vmem:[#allocation7 + $0x140] sm:$0xff]
    %v105 = vld [vmem:[#allocation7 + $0x148] sm:$0xff]
    %v106 = vld [vmem:[#allocation7 + $0x150] sm:$0xff]
    %v107 = vld [vmem:[#allocation7 + $0x158] sm:$0xff]
    %v108 = vld [vmem:[#allocation7 + $0x160] sm:$0xff]
    %v109 = vld [vmem:[#allocation7 + $0x168] sm:$0xff]
    %v110 = vld [vmem:[#allocation7 + $0x170] sm:$0xff]
    %v111 = vld [vmem:[#allocation7 + $0x178] sm:$0xff]
    %v112 = vld [vmem:[#allocation7 + $0x180] sm:$0xff]
    %v113 = vld [vmem:[#allocation7 + $0x188] sm:$0xff]
    %v114 = vld [vmem:[#allocation7 + $0x190] sm:$0xff]
    %v115 = vld [vmem:[#allocation7 + $0x198] sm:$0xff]
    %v116 = vld [vmem:[#allocation7 + $0x1a0] sm:$0xff]
    %v117 = vld [vmem:[#allocation7 + $0x1a8] sm:$0xff]
    %v118 = vld [vmem:[#allocation7 + $0x1b0] sm:$0xff]
    %v119 = vld [vmem:[#allocation7 + $0x1b8] sm:$0xff]
    %v120 = vld [vmem:[#allocation7 + $0x1c0] sm:$0xff]
    %v121 = vld [vmem:[#allocation7 + $0x1c8] sm:$0xff]
    %v122 = vld [vmem:[#allocation7 + $0x1d0] sm:$0xff]
    %v123 = vld [vmem:[#allocation7 + $0x1d8] sm:$0xff]
    %v124 = vld [vmem:[#allocation7 + $0x1e0] sm:$0xff]
    %v125 = vld [vmem:[#allocation7 + $0x1e8] sm:$0xff]
    %v126 = vld [vmem:[#allocation7 + $0x1f0] sm:$0xff]
    %v127 = vld [vmem:[#allocation7 + $0x1f8] sm:$0xff]
    %v128 = vpack.c.bf16 %v68, %v64
    %v129 = vpack.c.bf16 %v69, %v65
    %v130 = vpack.c.bf16 %v70, %v66
    %v131 = vpack.c.bf16 %v71, %v67
    %v132 = vpack.c.bf16 %v76, %v72
    %v133 = vpack.c.bf16 %v77, %v73
    %v134 = vpack.c.bf16 %v78, %v74
    %v135 = vpack.c.bf16 %v79, %v75
    %v136 = vpack.c.bf16 %v84, %v80
    %v137 = vpack.c.bf16 %v85, %v81
    %v138 = vpack.c.bf16 %v86, %v82
    %v139 = vpack.c.bf16 %v87, %v83
    %v140 = vpack.c.bf16 %v92, %v88
    %v141 = vpack.c.bf16 %v93, %v89
    %v142 = vpack.c.bf16 %v94, %v90
    %v143 = vpack.c.bf16 %v95, %v91
    %v144 = vpack.c.bf16 %v100, %v96
    %v145 = vpack.c.bf16 %v101, %v97
    %v146 = vpack.c.bf16 %v102, %v98
    %v147 = vpack.c.bf16 %v103, %v99
    %v148 = vpack.c.bf16 %v108, %v104
    %v149 = vpack.c.bf16 %v109, %v105
    %v150 = vpack.c.bf16 %v110, %v106
    %v151 = vpack.c.bf16 %v111, %v107
    %v152 = vpack.c.bf16 %v116, %v112
    %v153 = vpack.c.bf16 %v117, %v113
    %v154 = vpack.c.bf16 %v118, %v114
    %v155 = vpack.c.bf16 %v119, %v115
    %v156 = vpack.c.bf16 %v124, %v120
    %v157 = vpack.c.bf16 %v125, %v121
    %v158 = vpack.c.bf16 %v126, %v122
    %v159 = vpack.c.bf16 %v127, %v123
    %160 = vmatprep.subr.bf16.mxu0 %v129
    %161 = vmatpush1.bf16.msra.mxu0 %v128
    %162 = vmatprep.subr.bf16.mxu0 %v133
    %163 = vmatpush1.bf16.msra.mxu0 %v132
    %164 = vmatprep.subr.bf16.mxu0 %v137
    %165 = vmatpush1.bf16.msra.mxu0 %v136
    %166 = vmatprep.subr.bf16.mxu0 %v141
    %167 = vmatpush1.bf16.msra.mxu0 %v140
    %168 = vmatprep.subr.bf16.mxu0 %v145
    %169 = vmatpush1.bf16.msra.mxu0 %v144
    %170 = vmatprep.subr.bf16.mxu0 %v149
    %171 = vmatpush1.bf16.msra.mxu0 %v148
    %172 = vmatprep.subr.bf16.mxu0 %v153
    %173 = vmatpush1.bf16.msra.mxu0 %v152
    %174 = vmatprep.subr.bf16.mxu0 %v157
    %175 = vmatpush1.bf16.msra.mxu0 %v156
    %176 = vmatprep.subr.bf16.mxu0 0
    %177 = vmatpush1.bf16.msra.mxu0 0
    %178 = vmatprep.subr.bf16.mxu0 0
    %179 = vmatpush1.bf16.msra.mxu0 0
    %180 = vmatprep.subr.bf16.mxu0 0
    %181 = vmatpush1.bf16.msra.mxu0 0
    %182 = vmatprep.subr.bf16.mxu0 0
    %183 = vmatpush1.bf16.msra.mxu0 0
    %184 = vmatprep.subr.bf16.mxu0 0
    %185 = vmatpush1.bf16.msra.mxu0 0
    %186 = vmatprep.subr.bf16.mxu0 0
    %187 = vmatpush1.bf16.msra.mxu0 0
    %188 = vmatprep.subr.bf16.mxu0 0
    %189 = vmatpush1.bf16.msra.mxu0 0
    %190 = vmatprep.subr.bf16.mxu0 0
    %191 = vmatpush1.bf16.msra.mxu0 0
    %192 = vmatprep.mubr.bf16.mxu0 0
    %193 = vmatmul.mubr.bf16.gmra.mrb[0].mxu0 %v63
    %v194 = vpop.f32.mrb[0].mxu0
    %v195 = vadd.f32 0.0, %v194
    %v196 = vpop.f32.mrb[0].mxu0
    %v197 = vadd.f32 0.0, %v196
    %v198 = vpop.f32.mrb[0].mxu0
    %v199 = vadd.f32 0.0, %v198
    %v200 = vpop.f32.mrb[0].mxu0
    %v201 = vadd.f32 0.0, %v200
    %202 = vdwg.mxu0
    %203 = vmatprep.subr.bf16.mxu0 %v131
    %204 = vmatpush1.bf16.msra.mxu0 %v130
    %205 = vmatprep.subr.bf16.mxu0 %v135
    %206 = vmatpush1.bf16.msra.mxu0 %v134
    %207 = vmatprep.subr.bf16.mxu0 %v139
    %208 = vmatpush1.bf16.msra.mxu0 %v138
    %209 = vmatprep.subr.bf16.mxu0 %v143
    %210 = vmatpush1.bf16.msra.mxu0 %v142
    %211 = vmatprep.subr.bf16.mxu0 %v147
    %212 = vmatpush1.bf16.msra.mxu0 %v146
    %213 = vmatprep.subr.bf16.mxu0 %v151
    %214 = vmatpush1.bf16.msra.mxu0 %v150
    %215 = vmatprep.subr.bf16.mxu0 %v155
    %216 = vmatpush1.bf16.msra.mxu0 %v154
    %217 = vmatprep.subr.bf16.mxu0 %v159
    %218 = vmatpush1.bf16.msra.mxu0 %v158
    %219 = vmatprep.subr.bf16.mxu0 0
    %220 = vmatpush1.bf16.msra.mxu0 0
    %221 = vmatprep.subr.bf16.mxu0 0
    %222 = vmatpush1.bf16.msra.mxu0 0
    %223 = vmatprep.subr.bf16.mxu0 0
    %224 = vmatpush1.bf16.msra.mxu0 0
    %225 = vmatprep.subr.bf16.mxu0 0
    %226 = vmatpush1.bf16.msra.mxu0 0
    %227 = vmatprep.subr.bf16.mxu0 0
    %228 = vmatpush1.bf16.msra.mxu0 0
    %229 = vmatprep.subr.bf16.mxu0 0
    %230 = vmatpush1.bf16.msra.mxu0 0
    %231 = vmatprep.subr.bf16.mxu0 0
    %232 = vmatpush1.bf16.msra.mxu0 0
    %233 = vmatprep.subr.bf16.mxu0 0
    %234 = vmatpush1.bf16.msra.mxu0 0
    %235 = vmatprep.mubr.bf16.mxu0 0
    %236 = vmatmul.mubr.bf16.gmra.mrb[0].mxu0 %v63
    %v237 = vpop.f32.mrb[0].mxu0
    %v238 = vadd.f32 0.0, %v237
    %v239 = vpop.f32.mrb[0].mxu0
    %v240 = vadd.f32 0.0, %v239
    %v241 = vpop.f32.mrb[0].mxu0
    %v242 = vadd.f32 0.0, %v241
    %v243 = vpop.f32.mrb[0].mxu0
    %v244 = vadd.f32 0.0, %v243
    %245 = vdwg.mxu0
    %v246 = vmax.f32 %v195, 0.0
    %v247 = vmax.f32 %v197, 0.0
    %v248 = vmax.f32 %v238, 0.0
    %v249 = vmax.f32 %v240, 0.0
    %v250 = vmax.f32 %v199, 0.0
    %v251 = vmax.f32 %v201, 0.0
    %v252 = vmax.f32 %v242, 0.0
    %v253 = vmax.f32 %v244, 0.0
    %254 = vst [vmem:[#allocation8] sm:$0xff] %v246
    %255 = vst [vmem:[#allocation8 + $0x8] sm:$0xff] %v247
    %256 = vst [vmem:[#allocation8 + $0x10] sm:$0xff] %v248
    %257 = vst [vmem:[#allocation8 + $0x18] sm:$0xff] %v249
    %258 = vst [vmem:[#allocation8 + $0x20] sm:$0xff] %v250
    %259 = vst [vmem:[#allocation8 + $0x28] sm:$0xff] %v251
    %260 = vst [vmem:[#allocation8 + $0x30] sm:$0xff] %v252
    %261 = vst [vmem:[#allocation8 + $0x38] sm:$0xff] %v253
    // Predicated region
    $region26: #{_mlp_forward_perturb.1} parent=1 // pred_check
      _
    $region27: #{_mlp_forward_perturb.1} parent=1 // pred_check_branch
      %263 = sbr.rel (0) target = $region29
    $region28: #{_mlp_forward_perturb.1} parent=1 // pred_region
      %s265 = ssub.s32 1024, 1024
      %266 = vsyncadd [#allocation4], %s265
      %s267 = sshll.u32 [#allocation8], 4
      %s268 = int_to_ptr.vmem [resolvable:$true] %s267
      %273 = dma.vmem_to_hbm [thread:$0]  %s268, 1024, %s3, [#allocation4], 512, 512, 32
    $region29: #{_mlp_forward_perturb.1} parent=1 // pred_fallthru
      _
    // Predicated region
    $region30: #{_mlp_forward_perturb.1} parent=1 // pred_check
      _
    $region31: #{_mlp_forward_perturb.1} parent=1 // pred_check_branch
      %275 = sbr.rel (0) target = $region33
    $region32: #{_mlp_forward_perturb.1} parent=1 // pred_region
      %276 = dma.done [#allocation4], 1024
    $region33: #{_mlp_forward_perturb.1} parent=1 // pred_fallthru
      _
    %277 = vsyncpa [#allocation3], 1
    %278 = vsyncpa [#allocation6], 1
    %279 = vsyncpa [#allocation4], 1

</llo_original>
